<compile_context>
chip_gen: v7x
topology: tpu7x:2x2x1
jax: 0.10.0
libtpu: 0.0.40
codegen_flags: <defaults>
</compile_context>

<pallas_src>
import math
import functools

import jax
import jax.numpy as jnp
from jax import lax
from jax.experimental import pallas as pl
from jax.experimental.pallas import tpu as pltpu


# ---------------------------------------------------------------------------
# helpers
# ---------------------------------------------------------------------------
def _round_up(x, m):
    return (x + m - 1) // m * m


_TILE_LANE = (512, 384, 256, 128)
_TILE_M = (256, 128, 64, 32, 16)


def _pick_div(dim, candidates):
    for c in candidates:
        if c <= dim and dim % c == 0:
            return c
    return dim


def _pad2d(a, rows, cols):
    r, c = a.shape
    if r == rows and c == cols:
        return a
    return jnp.pad(a, ((0, rows - r), (0, cols - c)))


def _pad_axis(a, axis, new):
    if a.shape[axis] == new:
        return a
    pad = [(0, 0)] * a.ndim
    pad[axis] = (0, new - a.shape[axis])
    return jnp.pad(a, pad)


def _default_attn_tile():
    # 256-wide MXU on v6e/v7x; 128x128 on v5e.
    try:
        kind = jax.devices()[0].device_kind.lower()
        if "v5 lite" in kind or "v5e" in kind or "v5litepod" in kind:
            return 128
    except Exception:
        pass
    return 256


def _seq_geometry(S, pref_tile):
    """Padded token count Sp and attention tile t (t | Sp, Sp - S < t)."""
    budget = max(_round_up(S, 16) * 5 // 4, S + 16)   # keep pad waste modest
    for t in (256, 128, 64, 32, 16):
        if t > pref_tile:
            continue
        Sp = _round_up(S, t)
        if Sp <= budget:
            return Sp, t
    return _round_up(S, 16), 16


def _derived(cfg):
    D, F, ps = cfg["hidden"], cfg["mlp"], cfg["patch"]
    P = cfg["res"] // ps
    N = P * P
    S = 1 + N
    Sp, attn_tile = _seq_geometry(S, cfg.get("attn_tile_pref", _default_attn_tile()))
    return dict(P=P, N=N, S=S, Sp=Sp, attn_tile=attn_tile,
                Dp=_round_up(D, 128), Fp=_round_up(F, 128),
                Kp_patch=_round_up(3 * ps * ps, 128), Dh=D // cfg["heads"])


# ---------------------------------------------------------------------------
# tiled matmul (bias / GELU epilogue) -- all operands pre-padded & pre-cast
# ---------------------------------------------------------------------------
def _linear_kernel(x_ref, w_ref, b_ref, o_ref, acc_ref, *, activation):
    k_step = pl.program_id(2)

    @pl.when(k_step == 0)
    def _():
        acc_ref[...] = jnp.zeros_like(acc_ref)

    acc_ref[...] += jnp.dot(x_ref[...], w_ref[...],
                            preferred_element_type=jnp.float32)

    @pl.when(k_step == pl.num_programs(2) - 1)
    def _():
        y = acc_ref[...] + b_ref[...]
        if activation == "gelu":
            # TODO(synk): PyTorch nn.GELU() is exact (erf); tanh-approx is used
            # in-kernel (EUP tanh) to guarantee Mosaic lowering (~1e-3 max dev).
            y = jax.nn.gelu(y, approximate=True)
        o_ref[...] = y.astype(o_ref.dtype)


def linear(x, w, b, *, activation=None, out_dtype=jnp.bfloat16):
    """y = act(x @ w + b).  w: (Kp, Np) bf16 pre-padded; b: (1, Np) f32."""
    M, K = x.shape
    N = w.shape[1]
    Mp = _round_up(M, 16)
    xp = x if Mp == M else _pad_axis(x, 0, Mp)
    xp = xp.astype(jnp.bfloat16)
    tm = _pick_div(Mp, _TILE_M)
    tk = _pick_div(K, _TILE_LANE)
    tn = _pick_div(N, _TILE_LANE)

    out = pl.pallas_call(
        functools.partial(_linear_kernel, activation=activation),
        grid=(Mp // tm, N // tn, K // tk),
        in_specs=[
            pl.BlockSpec((tm, tk), lambda i, j, k: (i, k)),
            pl.BlockSpec((tk, tn), lambda i, j, k: (k, j)),
            pl.BlockSpec((1, tn), lambda i, j, k: (0, j)),
        ],
        out_specs=pl.BlockSpec((tm, tn), lambda i, j, k: (i, j)),
        out_shape=jax.ShapeDtypeStruct((Mp, N), out_dtype),
        scratch_shapes=[pltpu.VMEM((tm, tn), jnp.float32)],
        compiler_params=pltpu.CompilerParams(
            dimension_semantics=("parallel", "parallel", "arbitrary")),
    )(xp, w, b)
    return out[:M] if Mp != M else out


# ---------------------------------------------------------------------------
# matmul with fused (LayerScale + residual + LayerNorm) epilogue
#   outputs: x_new = residual + ls * (x @ w + b)   (f32 residual stream)
#            h     = LayerNorm(x_new)              (matmul-ready bf16/f32)
# ---------------------------------------------------------------------------
def _linear_res_ln_kernel(x_ref, w_ref, b_ref, ls_ref, res_ref, g_ref, bt_ref,
                          xo_ref, ho_ref, acc_ref, *, n_valid, eps):
    k_step = pl.program_id(1)

    @pl.when(k_step == 0)
    def _():
        acc_ref[...] = jnp.zeros_like(acc_ref)

    acc_ref[...] += jnp.dot(x_ref[...], w_ref[...],
                            preferred_element_type=jnp.float32)

    @pl.when(k_step == pl.num_programs(1) - 1)
    def _():
        xn = res_ref[...] + ls_ref[...] * (acc_ref[...] + b_ref[...])
        xo_ref[...] = xn.astype(xo_ref.dtype)
        # LayerNorm over the first n_valid features; padded columns stay zero.
        col = lax.broadcasted_iota(jnp.int32, xn.shape, 1)
        mask = col < n_valid
        xm = jnp.where(mask, xn, 0.0)
        mean = jnp.sum(xm, axis=-1, keepdims=True) * (1.0 / n_valid)
        xc = jnp.where(mask, xn - mean, 0.0)
        var = jnp.sum(xc * xc, axis=-1, keepdims=True) * (1.0 / n_valid)
        h = xc * lax.rsqrt(var + eps) * g_ref[...] + bt_ref[...]
        ho_ref[...] = h.astype(ho_ref.dtype)


def linear_res_ln(x, w, b, ls, residual, gamma, beta, n_valid, eps, *,
                  h_dtype=jnp.bfloat16):
    M, K = x.shape
    N = w.shape[1]
    Mp = _round_up(M, 16)
    xp = (x if Mp == M else _pad_axis(x, 0, Mp)).astype(jnp.bfloat16)
    rp = residual if Mp == M else _pad_axis(residual, 0, Mp)
    tm = _pick_div(Mp, _TILE_M)
    tk = _pick_div(K, _TILE_LANE)

    x_new, h = pl.pallas_call(
        functools.partial(_linear_res_ln_kernel, n_valid=n_valid, eps=eps),
        grid=(Mp // tm, K // tk),
        in_specs=[
            pl.BlockSpec((tm, tk), lambda i, k: (i, k)),
            pl.BlockSpec((tk, N), lambda i, k: (k, 0)),
            pl.BlockSpec((1, N), lambda i, k: (0, 0)),
            pl.BlockSpec((1, N), lambda i, k: (0, 0)),
            pl.BlockSpec((tm, N), lambda i, k: (i, 0)),
            pl.BlockSpec((1, N), lambda i, k: (0, 0)),
            pl.BlockSpec((1, N), lambda i, k: (0, 0)),
        ],
        out_specs=[pl.BlockSpec((tm, N), lambda i, k: (i, 0)),
                   pl.BlockSpec((tm, N), lambda i, k: (i, 0))],
        out_shape=(jax.ShapeDtypeStruct((Mp, N), jnp.float32),
                   jax.ShapeDtypeStruct((Mp, N), h_dtype)),
        scratch_shapes=[pltpu.VMEM((tm, N), jnp.float32)],
        compiler_params=pltpu.CompilerParams(
            dimension_semantics=("parallel", "arbitrary")),
    )(xp, w, b, ls, rp, gamma, beta)
    if Mp != M:
        x_new, h = x_new[:M], h[:M]
    return x_new, h


# ---------------------------------------------------------------------------
# standalone row-tiled LayerNorm (only used once, after the embedding)
# ---------------------------------------------------------------------------
def _layernorm_kernel(x_ref, g_ref, b_ref, o_ref, *, eps, n_valid):
    x = x_ref[...].astype(jnp.float32)
    col = lax.broadcasted_iota(jnp.int32, x.shape, 1)
    mask = col < n_valid
    xm = jnp.where(mask, x, 0.0)
    mean = jnp.sum(xm, axis=-1, keepdims=True) * (1.0 / n_valid)
    xc = jnp.where(mask, x - mean, 0.0)
    var = jnp.sum(xc * xc, axis=-1, keepdims=True) * (1.0 / n_valid)
    y = xc * lax.rsqrt(var + eps)
    o_ref[...] = (y * g_ref[...] + b_ref[...]).astype(o_ref.dtype)


def layernorm(x2d, gamma, beta, eps, n_valid, *, out_dtype=jnp.bfloat16):
    M, Np = x2d.shape
    Mp = _round_up(M, 16)
    xp = x2d if Mp == M else _pad_axis(x2d, 0, Mp)
    tm = _pick_div(Mp, _TILE_M)
    out = pl.pallas_call(
        functools.partial(_layernorm_kernel, eps=eps, n_valid=n_valid),
        grid=(Mp // tm,),
        in_specs=[pl.BlockSpec((tm, Np), lambda i: (i, 0)),
                  pl.BlockSpec((1, Np), lambda i: (0, 0)),
                  pl.BlockSpec((1, Np), lambda i: (0, 0))],
        out_specs=pl.BlockSpec((tm, Np), lambda i: (i, 0)),
        out_shape=jax.ShapeDtypeStruct((Mp, Np), out_dtype),
        compiler_params=pltpu.CompilerParams(dimension_semantics=("parallel",)),
    )(xp, gamma, beta)
    return out[:M] if Mp != M else out


# ---------------------------------------------------------------------------
# attention: reads Q/K/V straight from the (B, Sp, 3*Dp) qkv buffer
# (column block index selects the q/k/v slot), writes ctx token-major.
# ---------------------------------------------------------------------------
def _flash_attn_kernel(q_ref, k_ref, v_ref, o_ref, m_sc, l_sc, acc_sc,
                       *, scale, kv_len, tkv, H, Dh, Dp):
    kvb = pl.program_id(2)

    @pl.when(kvb == 0)
    def _():
        m_sc[...] = jnp.full_like(m_sc, -jnp.inf)
        l_sc[...] = jnp.zeros_like(l_sc)
        acc_sc[...] = jnp.zeros_like(acc_sc)

    kv_ids = kvb * tkv + lax.broadcasted_iota(jnp.int32, (1, tkv), 1)
    kv_mask = kv_ids < kv_len           # masks padded keys (last tile has >=1 real key)

    for h in range(H):                  # H is static; per-head MXU matmuls
        lo = h * Dh
        q_h = q_ref[0, :, lo:lo + Dh]
        k_h = k_ref[0, :, lo:lo + Dh]
        v_h = v_ref[0, :, lo:lo + Dh]
        s = lax.dot_general(q_h, k_h, (((1,), (1,)), ((), ())),
                            preferred_element_type=jnp.float32) * scale
        s = jnp.where(kv_mask, s, -1e30)
        m_prev = m_sc[h]
        m_new = jnp.maximum(m_prev, jnp.max(s, axis=-1, keepdims=True))
        alpha = jnp.exp(m_prev - m_new)
        p = jnp.exp(s - m_new)
        l_sc[h] = alpha * l_sc[h] + jnp.sum(p, axis=-1, keepdims=True)
        acc_sc[h] = alpha * acc_sc[h] + jnp.dot(
            p.astype(jnp.bfloat16), v_h, preferred_element_type=jnp.float32)
        m_sc[h] = m_new

    @pl.when(kvb == pl.num_programs(2) - 1)
    def _():
        for h in range(H):
            lo = h * Dh
            o_ref[0, :, lo:lo + Dh] = (acc_sc[h] / l_sc[h]).astype(o_ref.dtype)
        if Dp > H * Dh:                 # keep lane padding exactly zero
            o_ref[0, :, H * Dh:] = jnp.zeros(
                (o_ref.shape[1], Dp - H * Dh), o_ref.dtype)


def mha_flash(qkv3, *, H, Dh, S, tile):
    """qkv3: (B, Sp, 3*Dp) bf16 -> ctx (B, Sp, Dp) bf16 (token-major)."""
    B, Sp, threeDp = qkv3.shape
    Dp = threeDp // 3
    t = min(tile, Sp)
    # mask invariant: the last KV tile always contains at least one real key.
    assert Sp % t == 0 and Sp - S < t
    kernel = functools.partial(_flash_attn_kernel, scale=1.0 / math.sqrt(Dh),
                               kv_len=S, tkv=t, H=H, Dh=Dh, Dp=Dp)
    return pl.pallas_call(
        kernel,
        grid=(B, Sp // t, Sp // t),
        in_specs=[
            pl.BlockSpec((1, t, Dp), lambda b, qi, ki: (b, qi, 0)),
            pl.BlockSpec((1, t, Dp), lambda b, qi, ki: (b, ki, 1)),
            pl.BlockSpec((1, t, Dp), lambda b, qi, ki: (b, ki, 2)),
        ],
        out_specs=pl.BlockSpec((1, t, Dp), lambda b, qi, ki: (b, qi, 0)),
        out_shape=jax.ShapeDtypeStruct((B, Sp, Dp), jnp.bfloat16),
        scratch_shapes=[pltpu.VMEM((H, t, 1), jnp.float32),
                        pltpu.VMEM((H, t, 1), jnp.float32),
                        pltpu.VMEM((H, t, Dh), jnp.float32)],
        compiler_params=pltpu.CompilerParams(
            dimension_semantics=("parallel", "parallel", "arbitrary")),
    )(qkv3, qkv3, qkv3)


def _attn_probs_kernel(q_ref, k_ref, v_ref, o_ref, p_ref,
                       *, scale, kv_len, H, Dh, Dp):
    kv_mask = lax.broadcasted_iota(jnp.int32, (1, k_ref.shape[1]), 1) < kv_len
    for h in range(H):
        lo = h * Dh
        q_h = q_ref[0, :, lo:lo + Dh]
        k_h = k_ref[0, :, lo:lo + Dh]
        v_h = v_ref[0, :, lo:lo + Dh]
        s = lax.dot_general(q_h, k_h, (((1,), (1,)), ((), ())),
                            preferred_element_type=jnp.float32) * scale
        s = jnp.where(kv_mask, s, -1e30)
        m = jnp.max(s, axis=-1, keepdims=True)
        e = jnp.exp(s - m)
        p = e / jnp.sum(e, axis=-1, keepdims=True)          # exact normalization
        p_ref[0, h] = p.astype(p_ref.dtype)
        o_ref[0, :, lo:lo + Dh] = jnp.dot(
            p.astype(jnp.bfloat16), v_h,
            preferred_element_type=jnp.float32).astype(o_ref.dtype)
    if Dp > H * Dh:
        o_ref[0, :, H * Dh:] = jnp.zeros((o_ref.shape[1], Dp - H * Dh), o_ref.dtype)


def mha_probs(qkv3, *, H, Dh, S):
    """Variant that also materializes attention probabilities (bf16)."""
    B, Sp, threeDp = qkv3.shape
    Dp = threeDp // 3
    tq = _pick_div(Sp, (128, 64, 32, 16))
    kernel = functools.partial(_attn_probs_kernel, scale=1.0 / math.sqrt(Dh),
                               kv_len=S, H=H, Dh=Dh, Dp=Dp)
    ctx, probs = pl.pallas_call(
        kernel,
        grid=(B, Sp // tq),
        in_specs=[
            pl.BlockSpec((1, tq, Dp), lambda b, qi: (b, qi, 0)),
            pl.BlockSpec((1, Sp, Dp), lambda b, qi: (b, 0, 1)),
            pl.BlockSpec((1, Sp, Dp), lambda b, qi: (b, 0, 2)),
        ],
        out_specs=[
            pl.BlockSpec((1, tq, Dp), lambda b, qi: (b, qi, 0)),
            pl.BlockSpec((1, H, tq, Sp), lambda b, qi: (b, 0, qi, 0)),
        ],
        out_shape=(
            jax.ShapeDtypeStruct((B, Sp, Dp), jnp.bfloat16),
            # TODO(synk): probabilities emitted bf16 (halves writeback); HF returns f32.
            jax.ShapeDtypeStruct((B, H, Sp, Sp), jnp.bfloat16),
        ),
        compiler_params=pltpu.CompilerParams(
            dimension_semantics=("parallel", "parallel")),
    )(qkv3, qkv3, qkv3)
    return ctx, probs


# ---------------------------------------------------------------------------
# shifted-patch recovery: fused gather (one-hot MXU matmul) + exact combine
# ---------------------------------------------------------------------------
def _recover_kernel(oh_ref, f_ref, o_ref, *, counts):
    acc = jnp.zeros(o_ref.shape[1:], jnp.float32)
    cnt = jnp.zeros((o_ref.shape[1], 1), jnp.float32)
    for c in range(counts):
        oh = oh_ref[0, c]                                # (N_dst, Sp)
        x = f_ref[0, c]                                  # (Sp, Dp)
        acc = acc + jnp.dot(oh, x, preferred_element_type=jnp.float32)
        cnt = cnt + jnp.sum(oh, axis=-1, keepdims=True)
    # TODO(synk): uncovered destinations are NaN in the torch reference; the
    # max(.,1) zero-guard returns 0 there instead (documented divergence).
    o_ref[0] = acc / jnp.maximum(cnt, 1.0)


def recover_combine(onehot, feats):
    """onehot: (Bo, counts, N, Sp) f32; feats: (Bo, counts, Sp, Dp) f32 -> (Bo, N, Dp)."""
    Bo, counts, Nd, Sp = onehot.shape
    Dp = feats.shape[-1]
    return pl.pallas_call(
        functools.partial(_recover_kernel, counts=counts),
        grid=(Bo,),
        in_specs=[pl.BlockSpec((1, counts, Nd, Sp), lambda b: (b, 0, 0, 0)),
                  pl.BlockSpec((1, counts, Sp, Dp), lambda b: (b, 0, 0, 0))],
        out_specs=pl.BlockSpec((1, Nd, Dp), lambda b: (b, 0, 0)),
        out_shape=jax.ShapeDtypeStruct((Bo, Nd, Dp), jnp.float32),
        compiler_params=pltpu.CompilerParams(dimension_semantics=("parallel",)),
    )(onehot, feats)


# ---------------------------------------------------------------------------
# Synthetic DINOv2-style model (deterministic init; eval-mode teacher)
# All parameters are stored pre-padded / pre-cast to their kernel layouts.
# ---------------------------------------------------------------------------
def init_params(key, cfg):
    dv = _derived(cfg)
    D, F, L = cfg["hidden"], cfg["mlp"], cfg["layers"]
    ps = cfg["patch"]
    S, Sp, Dp, Fp, Kp = dv["S"], dv["Sp"], dv["Dp"], dv["Fp"], dv["Kp_patch"]
    keys = iter(jax.random.split(key, 4 + 12 * L))
    bf = jnp.bfloat16

    def rnd(shape, scale=0.02):
        return scale * jax.random.normal(next(keys), shape, dtype=jnp.float32)

    def pad_w(w, rows, cols):
        return _pad2d(w, rows, cols).astype(bf)

    def pad_v(v, cols):
        return _pad2d(v.reshape(1, -1), 1, cols).astype(jnp.float32)

    params = {
        "patch_w": pad_w(rnd((3 * ps * ps, D)), Kp, Dp),
        "patch_b": pad_v(rnd((D,)), Dp),
        "cls": jnp.pad(rnd((1, 1, D)), ((0, 0), (0, 0), (0, Dp - D))),
        "pos": jnp.pad(rnd((1, S, D)), ((0, 0), (0, Sp - S), (0, Dp - D))),
        "ln_g": pad_v(jnp.ones((D,), jnp.float32), Dp),
        "ln_b": pad_v(jnp.zeros((D,), jnp.float32), Dp),
        "layers": [],
    }
    for _ in range(L):
        wq, wk, wv = rnd((D, D)), rnd((D, D)), rnd((D, D))
        qkv_w = jnp.concatenate(
            [_pad2d(wq, Dp, Dp), _pad2d(wk, Dp, Dp), _pad2d(wv, Dp, Dp)],
            axis=1).astype(bf)
        b3 = rnd((3 * D,))
        qkv_b = jnp.concatenate(
            [pad_v(b3[0:D], Dp), pad_v(b3[D:2 * D], Dp), pad_v(b3[2 * D:], Dp)],
            axis=1)
        ls1 = pad_v(1.0 + 0.1 * jax.random.normal(next(keys), (D,), jnp.float32), Dp)
        fc1_w, fc1_b = pad_w(rnd((D, F)), Dp, Fp), pad_v(rnd((F,)), Fp)
        fc2_w, fc2_b = pad_w(rnd((F, D)), Fp, Dp), pad_v(rnd((D,)), Dp)
        ls2 = pad_v(1.0 + 0.1 * jax.random.normal(next(keys), (D,), jnp.float32), Dp)
        params["layers"].append({
            "n1_g": pad_v(jnp.ones((D,), jnp.float32), Dp),
            "n1_b": pad_v(jnp.zeros((D,), jnp.float32), Dp),
            "qkv_w": qkv_w, "qkv_b": qkv_b,
            "o_w": pad_w(rnd((D, D)), Dp, Dp), "o_b": pad_v(rnd((D,)), Dp),
            "ls1": ls1,
            "n2_g": pad_v(jnp.ones((D,), jnp.float32), Dp),
            "n2_b": pad_v(jnp.zeros((D,), jnp.float32), Dp),
            "fc1_w": fc1_w, "fc1_b": fc1_b,
            "fc2_w": fc2_w, "fc2_b": fc2_b,
            "ls2": ls2,
        })
    return params


def embed_images(images, params, cfg):
    """images: (B, 3, R, R) f32 -> tokens (B, Sp, Dp) f32, zero-padded rows/cols."""
    dv = _derived(cfg)
    B = images.shape[0]
    ps, P, N = cfg["patch"], dv["P"], dv["N"]
    Dp, Sp = dv["Dp"], dv["Sp"]
    patches = images.reshape(B, 3, P, ps, P, ps).transpose(0, 2, 4, 1, 3, 5)
    patches = patches.reshape(B * N, 3 * ps * ps)
    patches = _pad_axis(patches, 1, params["patch_w"].shape[0]).astype(jnp.bfloat16)
    tok = linear(patches, params["patch_w"], params["patch_b"],
                 out_dtype=jnp.float32).reshape(B, N, Dp)
    cls = jnp.broadcast_to(params["cls"], (B, 1, Dp))
    x = jnp.concatenate([cls, tok], axis=1)
    x = _pad_axis(x, 1, Sp) + params["pos"]
    return x


def forward_images(images, params, cfg, output_attentions, output_hidden_states):
    dv = _derived(cfg)
    D, H, Dh = cfg["hidden"], cfg["heads"], dv["Dh"]
    Dp, Sp, S = dv["Dp"], dv["Sp"], dv["S"]
    eps = cfg["eps"]
    L = cfg["layers"]

    x = embed_images(images, params, cfg)                 # (B, Sp, Dp) f32
    B = x.shape[0]
    x2 = x.reshape(B * Sp, Dp)
    hidden_states = (x[:, :S, :D],) if output_hidden_states else None
    attentions = () if output_attentions else None

    # first LN1 runs standalone; every subsequent LN is fused into a matmul epilogue
    h = layernorm(x2, params["layers"][0]["n1_g"], params["layers"][0]["n1_b"],
                  eps, n_valid=D)

    for li, lp in enumerate(params["layers"]):
        qkv = linear(h, lp["qkv_w"], lp["qkv_b"])         # (B*Sp, 3Dp) bf16
        qkv3 = qkv.reshape(B, Sp, 3 * Dp)                 # free reshape, no transpose
        if output_attentions:
            ctx, probs = mha_probs(qkv3, H=H, Dh=Dh, S=S)
        else:
            ctx = mha_flash(qkv3, H=H, Dh=Dh, S=S, tile=dv["attn_tile"])
            probs = None
        ctx2 = ctx.reshape(B * Sp, Dp)                    # token-major, no transpose
        # fused: x = x + ls1 * (ctx @ Wo + bo) ; h = LN2(x)
        x2, h = linear_res_ln(ctx2, lp["o_w"], lp["o_b"], lp["ls1"], x2,
                              lp["n2_g"], lp["n2_b"], D, eps)
        h2 = linear(h, lp["fc1_w"], lp["fc1_b"], activation="gelu")
        if li + 1 < L:
            g, bt, hdt = (params["layers"][li + 1]["n1_g"],
                          params["layers"][li + 1]["n1_b"], jnp.bfloat16)
        else:
            g, bt, hdt = params["ln_g"], params["ln_b"], jnp.float32
        # fused: x = x + ls2 * mlp_out ; h = next-LN(x) (final encoder LN on last layer)
        x2, h = linear_res_ln(h2, lp["fc2_w"], lp["fc2_b"], lp["ls2"], x2,
                              g, bt, D, eps, h_dtype=hdt)
        if output_hidden_states:
            hidden_states = hidden_states + (x2.reshape(B, Sp, Dp)[:, :S, :D],)
        if output_attentions:
            attentions = attentions + (probs[:, :, :S, :S],)

    norm_out = h.reshape(B, Sp, Dp)                       # f32, final LN output (padded)
    return {"last_hidden_state": norm_out,
            "hidden_states": hidden_states,
            "attentions": attentions}


def aug_dinov2_forward(params, cfg, args_dict, shifted_images, shifted_idxs,
                       output_attentions=False, output_hidden_states=False):
    dv = _derived(cfg)
    R = args_dict["resolution"]
    counts = args_dict["counts"]
    P = R // args_dict["patch_size"]
    N = P * P
    D, Dp, Sp = cfg["hidden"], dv["Dp"], dv["Sp"]

    images = shifted_images.reshape(-1, 3, R, R)
    idxs = shifted_idxs.reshape(-1, 2, P, P).astype(jnp.int32)

    out = forward_images(images, params, cfg, output_attentions, output_hidden_states)
    feats = out["last_hidden_state"]                      # (B, Sp, Dp) f32, padded
    B = feats.shape[0]

    xc = idxs[:, 0].reshape(B, N)
    yc = idxs[:, 1].reshape(B, N)
    valid = (xc >= 0) & (yc >= 0)
    dest = jnp.where(valid, xc * P + yc, -1)              # source patch n -> destination
    # one-hot: oh[b, d, n] = 1 iff source patch n lands on destination d;
    # token column offset +1 skips CLS, zero cols cover padded tokens.
    # TODO(synk): duplicate destinations sum here; torch index-assign takes the
    # last writer (shift maps are injective, so no difference in practice).
    oh = (dest[:, None, :] == jnp.arange(N)[None, :, None]).astype(jnp.float32)
    oh = jnp.pad(oh, ((0, 0), (0, 0), (1, Sp - 1 - N)))
    oh = oh.reshape(-1, counts, N, Sp)
    feats_g = feats.reshape(-1, counts, Sp, Dp)

    combined = recover_combine(oh, feats_g)               # (Bo, N, Dp) f32
    # permute(0,3,1,2).flatten(2).transpose(1,2) on (Bo,P,P,D) == (Bo, P*P, D) row-major
    out["last_hidden_state"] = combined[:, :, :D]
    return out


# ---------------------------------------------------------------------------
if __name__ == "__main__":
    # small synthetic config: hidden=32, 2 layers, 2 heads, patch=8, res=32 -> P=4
    cfg = dict(hidden=32, heads=2, mlp=64, layers=2, patch=8, res=32, eps=1e-6)
    args_dict = dict(resolution=32, patch_size=8, counts=2)
    Bo = 2
    counts = args_dict["counts"]
    P = args_dict["resolution"] // args_dict["patch_size"]
    N = P * P
    S = 1 + N
    B = Bo * counts

    key = jax.random.PRNGKey(0)
    k_par, k_img = jax.random.split(key)
    params = init_params(k_par, cfg)

    shifted_images = jax.random.normal(
        k_img, (Bo, counts, 3, args_dict["resolution"], args_dict["resolution"]),
        dtype=jnp.float32)

    # shifted_idxs: count 0 = identity placement, count 1 = shift up by one row
    # (top row sources marked invalid with -1), so every destination is covered.
    hh, ww = jnp.meshgrid(jnp.arange(P), jnp.arange(P), indexing="ij")
    ident = jnp.stack([hh, ww], axis=0)                            # (2, P, P)
    shift = jnp.stack([hh - 1, ww], axis=0)
    shift = jnp.where((hh - 1 >= 0)[None], shift, -1)
    idxs_one = jnp.stack([ident, shift], axis=0)                   # (counts, 2, P, P)
    shifted_idxs = jnp.broadcast_to(
        idxs_one[None], (Bo, counts, 2, P, P)).astype(jnp.int32)

    # standalone check of the recovery kernel against a pure-jnp reference
    koh, kft = jax.random.split(jax.random.PRNGKey(1))
    oh_t = (jax.random.uniform(koh, (2, 2, 16, 32)) > 0.8).astype(jnp.float32)
    ft_t = jax.random.normal(kft, (2, 2, 32, 128), dtype=jnp.float32)
    got = recover_combine(oh_t, ft_t)
    want = jnp.einsum("bcns,bcsd->bnd", oh_t, ft_t) / jnp.maximum(
        jnp.einsum("bcns->bn", oh_t), 1.0)[..., None]
    jax.block_until_ready(got)
    assert float(jnp.max(jnp.abs(got - want))) < 1e-2

    @functools.partial(jax.jit,
                       static_argnames=("output_attentions", "output_hidden_states"))
    def run(params, images, idxs, output_attentions, output_hidden_states):
        return aug_dinov2_forward(params, cfg, args_dict, images, idxs,
                                  output_attentions=output_attentions,
                                  output_hidden_states=output_hidden_states)

    # path 1: probability-materializing attention + hidden states
    out = run(params, shifted_images, shifted_idxs,
              output_attentions=True, output_hidden_states=True)
    jax.block_until_ready(out["last_hidden_state"])
    assert out["last_hidden_state"].shape == (Bo, N, cfg["hidden"])
    assert len(out["hidden_states"]) == cfg["layers"] + 1
    assert out["hidden_states"][0].shape == (B, S, cfg["hidden"])
    assert len(out["attentions"]) == cfg["layers"]
    assert out["attentions"][0].shape == (B, cfg["heads"], S, S)

    # path 2: flash attention (no probs) -- must agree with path 1
    out2 = run(params, shifted_images, shifted_idxs,
               output_attentions=False, output_hidden_states=False)
    jax.block_until_ready(out2["last_hidden_state"])
    a = out["last_hidden_state"].astype(jnp.float32)
    c = out2["last_hidden_state"].astype(jnp.float32)
    assert bool(jnp.isfinite(a).all()) and bool(jnp.isfinite(c).all())
    assert float(jnp.max(jnp.abs(a - c))) < 0.15
    print("KERNEL_OK")
</pallas_src>

<mosaic_0001>
module attributes {stable_mosaic.version = 11 : i64} {
  func.func @_recover_kernel(%arg0: i32, %arg1: memref<1x2x16x32xf32, #tpu.memory_space<vmem>>, %arg2: memref<1x2x32x128xf32, #tpu.memory_space<vmem>>, %arg3: memref<1x16x128xf32, #tpu.memory_space<vmem>>) attributes {dimension_semantics = [#tpu.dimension_semantics<parallel>], iteration_bounds = array<i64: 2>, scalar_prefetch = 0 : i64, scratch_operands = 0 : i64, tpu.core_type = #tpu.core_type<tc>, window_params = [{transform_indices = @transform_0, window_bounds = array<i64: 1, 2, 16, 32>}, {transform_indices = @transform_1, window_bounds = array<i64: 1, 2, 32, 128>}, {transform_indices = @transform_2, window_bounds = array<i64: 1, 16, 128>}]} {
    %cst = arith.constant 0.000000e+00 : f32
    %0 = vector.broadcast %cst : f32 to vector<16x128xf32>
    %cst_0 = arith.constant 0.000000e+00 : f32
    %1 = vector.broadcast %cst_0 : f32 to vector<16x1xf32>
    %c0 = arith.constant 0 : index
    %c0_1 = arith.constant 0 : index
    %c0_2 = arith.constant 0 : index
    %c0_3 = arith.constant 0 : index
    %2 = vector.load %arg1[%c0, %c0_1, %c0_2, %c0_3] : memref<1x2x16x32xf32, #tpu.memory_space<vmem>>, vector<1x1x16x32xf32>
    %3 = vector.shape_cast %2 : vector<1x1x16x32xf32> to vector<16x32xf32>
    %c0_4 = arith.constant 0 : index
    %c0_5 = arith.constant 0 : index
    %c0_6 = arith.constant 0 : index
    %c0_7 = arith.constant 0 : index
    %4 = vector.load %arg2[%c0_4, %c0_5, %c0_6, %c0_7] : memref<1x2x32x128xf32, #tpu.memory_space<vmem>>, vector<1x1x32x128xf32>
    %5 = vector.shape_cast %4 : vector<1x1x32x128xf32> to vector<32x128xf32>
    %cst_8 = arith.constant dense<0.000000e+00> : vector<16x128xf32>
    %6 = tpu.matmul %3, %5, %cst_8 {dimension_numbers = #tpu.dot_dimension_numbers<[1], [0], [0], [1], [0, 0, 1, 1], [], []>} : vector<16x32xf32>, vector<32x128xf32>, vector<16x128xf32> -> vector<16x128xf32>
    %7 = arith.addf %0, %6 : vector<16x128xf32>
    %cst_9 = arith.constant dense<0.000000e+00> : vector<16xf32>
    %8 = vector.multi_reduction <add>, %3, %cst_9 [1] : vector<16x32xf32> to vector<16xf32>
    %9 = vector.shape_cast %8 : vector<16xf32> to vector<16x1xf32>
    %10 = arith.addf %1, %9 : vector<16x1xf32>
    %c0_10 = arith.constant 0 : index
    %c1 = arith.constant 1 : index
    %c0_11 = arith.constant 0 : index
    %c0_12 = arith.constant 0 : index
    %11 = vector.load %arg1[%c0_10, %c1, %c0_11, %c0_12] : memref<1x2x16x32xf32, #tpu.memory_space<vmem>>, vector<1x1x16x32xf32>
    %12 = vector.shape_cast %11 : vector<1x1x16x32xf32> to vector<16x32xf32>
    %c0_13 = arith.constant 0 : index
    %c1_14 = arith.constant 1 : index
    %c0_15 = arith.constant 0 : index
    %c0_16 = arith.constant 0 : index
    %13 = vector.load %arg2[%c0_13, %c1_14, %c0_15, %c0_16] : memref<1x2x32x128xf32, #tpu.memory_space<vmem>>, vector<1x1x32x128xf32>
    %14 = vector.shape_cast %13 : vector<1x1x32x128xf32> to vector<32x128xf32>
    %cst_17 = arith.constant dense<0.000000e+00> : vector<16x128xf32>
    %15 = tpu.matmul %12, %14, %cst_17 {dimension_numbers = #tpu.dot_dimension_numbers<[1], [0], [0], [1], [0, 0, 1, 1], [], []>} : vector<16x32xf32>, vector<32x128xf32>, vector<16x128xf32> -> vector<16x128xf32>
    %16 = arith.addf %7, %15 : vector<16x128xf32>
    %cst_18 = arith.constant dense<0.000000e+00> : vector<16xf32>
    %17 = vector.multi_reduction <add>, %12, %cst_18 [1] : vector<16x32xf32> to vector<16xf32>
    %18 = vector.shape_cast %17 : vector<16xf32> to vector<16x1xf32>
    %19 = arith.addf %10, %18 : vector<16x1xf32>
    %cst_19 = arith.constant 1.000000e+00 : f32
    %20 = vector.broadcast %cst_19 : f32 to vector<16x1xf32>
    %21 = arith.maximumf %19, %20 : vector<16x1xf32>
    %22 = vector.broadcast %21 : vector<16x1xf32> to vector<16x128xf32>
    %23 = arith.divf %16, %22 : vector<16x128xf32>
    %c0_20 = arith.constant 0 : index
    %c0_21 = arith.constant 0 : index
    %c0_22 = arith.constant 0 : index
    %24 = vector.load %arg3[%c0_20, %c0_21, %c0_22] : memref<1x16x128xf32, #tpu.memory_space<vmem>>, vector<1x16x128xf32>
    %25 = vector.shape_cast %24 : vector<1x16x128xf32> to vector<16x128xf32>
    %26 = vector.shape_cast %23 : vector<16x128xf32> to vector<1x16x128xf32>
    tpu.vector_store %arg3[%c0_20, %c0_21, %c0_22], %26 {strides = array<i32>} : memref<1x16x128xf32, #tpu.memory_space<vmem>>, vector<1x16x128xf32>,
    return
  }
  func.func @transform_0(%arg0: i32) -> (i32, i32, i32, i32) {
    %c0_i32 = arith.constant 0 : i32
    %c0_i32_0 = arith.constant 0 : i32
    %c0_i32_1 = arith.constant 0 : i32
    %c0_i32_2 = arith.constant 0 : i32
    return %arg0, %c0_i32, %c0_i32_0, %c0_i32_1 : i32, i32, i32, i32
  }
  func.func @transform_1(%arg0: i32) -> (i32, i32, i32, i32) {
    %c0_i32 = arith.constant 0 : i32
    %c0_i32_0 = arith.constant 0 : i32
    %c0_i32_1 = arith.constant 0 : i32
    %c0_i32_2 = arith.constant 0 : i32
    return %arg0, %c0_i32, %c0_i32_0, %c0_i32_1 : i32, i32, i32, i32
  }
  func.func @transform_2(%arg0: i32) -> (i32, i32, i32) {
    %c0_i32 = arith.constant 0 : i32
    %c0_i32_0 = arith.constant 0 : i32
    %c0_i32_1 = arith.constant 0 : i32
    return %arg0, %c0_i32, %c0_i32_0 : i32, i32, i32
  }
}

</mosaic_0001>

<llo_original>
// kernel: tpu_custom_call.1
$region0: #{tpu_custom_call.1}
  #allocation0 [shape = 'u32[]', space=smem, size = 0x4, offset = 0x4, fixed_abs, tag = 'smem constant byte address 0x4 - core index']
  #allocation1 [shape = 'u32[144,128]{1,0:T(1,128)}', space=vmem, size = 0x12000, scoped, tag = 'internal scratch']
  %s0 = inlined_call_operand.hbm [shape: f32[2,2,16,32], index: 0, kind: input, shape index: {}]
  %s1 = inlined_call_operand.hbm [shape: f32[2,2,32,128], index: 1, kind: input, shape index: {}]
  %s2 = inlined_call_operand.hbm [shape: f32[2,16,128], index: 2, kind: output, shape index: {}]
  %s3 = sld [smem:[#allocation0]]
  $region49: #{tpu_custom_call.1} parent=0
    _
  %s5 = ssub.s32 1, %s3
  %s6 = scalar_select 0, %s5, %s3
  $region1: #{tpu_custom_call.1} parent=0
    #allocation2 [shape = 'u8[32768]{0}', space=vmem, size = 0x8000, scoped, tag = 'input window, operand 0']
    #allocation3 [shape = 's32[2]{0}', space=sflag, size = 0x8, scoped, tag = 'scoped memory for tpu_custom_call.1']
    #allocation4 [shape = 's32[2]{0}', space=sflag, size = 0x8, scoped, tag = 'scoped memory for tpu_custom_call.1']
    #allocation5 [shape = 'u8[65536]{0}', space=vmem, size = 0x10000, scoped, tag = 'input window, operand 1']
    #allocation6 [shape = 's32[2]{0}', space=sflag, size = 0x8, scoped, tag = 'scoped memory for tpu_custom_call.1']
    #allocation7 [shape = 'u8[16384]{0}', space=vmem, size = 0x4000, scoped, tag = 'output window, operand 0']
    %7 = vsyncpa [#allocation3], 0
    %s8 = scalar_lea.sflag [#allocation3], 1
    %9 = vsyncpa %s8, 0
    %10 = vsyncpa [#allocation6], 0
    %s11 = scalar_lea.sflag [#allocation6], 1
    %12 = vsyncpa %s11, 0
    %13 = vsyncpa [#allocation4], 0
    %s14 = scalar_lea.sflag [#allocation4], 1
    %15 = vsyncpa %s14, 0
    loop: start=0, step=1, limit=4
    $region2: #{tpu_custom_call.1} parent=1 // loop_pre_header
      _
    $region3: #{tpu_custom_call.1} parent=1 // loop_header
      %s17 = sphi 0, %s21
      %p18 = scmp.ge.s32.totalorder %s17, 4
      %s27 = sphi 0, %s29
      %s30 = sphi 0, %s27
      %s31 = sphi 0, %s30
      %s47 = sphi 0, %s31
      %s53 = sphi 0, %s55
      %s56 = sphi 0, %s53
      %s57 = sphi 0, %s56
      %s73 = sphi 0, %s57
      %s79 = sphi 0, %s81
      %s82 = sphi 0, %s79
      %s83 = sphi 0, %s82
      %s99 = sphi 0, %s83
    $region4: #{tpu_custom_call.1} parent=1 // loop_header_branch
      %20 = sbr.rel (%p18) target = $region8
    $region5: #{tpu_custom_call.1} parent=1 // loop_body
      %s22 = ssub.s32 %s17, 1
      %s23 = ssub.s32 %s17, 2
      %s24 = sadd.s32 %s17, 1
      %s25 = ssub.s32 %s17, %s24
      %p26 = scmp.eq.s32.totalorder %s25, 0
      %s28 = sadd.s32 %s27, 1
      %s29 = scalar_select %p26, %s27, %s28
      %p32 = pneg %p26
      %p33 = scmp.eq.s32.totalorder %s17, 1
      %p34 = por %p32, %p33
      %p35 = scmp.ne.s32.totalorder %s27, %s30
      %p36 = scmp.eq.s32.totalorder %s17, 0
      %p37 = por %p35, %p36
      %p38 = scmp.ne.s32.totalorder %s27, %s30
      %p39 = scmp.eq.s32.totalorder %s22, 1
      %p40 = por %p38, %p39
      %p41 = scmp.ne.s32.totalorder %s30, %s31
      %p42 = scmp.eq.s32.totalorder %s22, 0
      %p43 = por %p41, %p42
      %p44 = scmp.ne.s32.totalorder %s30, %s31
      %p45 = scmp.eq.s32.totalorder %s23, 1
      %p46 = por %p44, %p45
      %p48 = scmp.ne.s32.totalorder %s31, %s47
      %p49 = scmp.eq.s32.totalorder %s23, 0
      %p50 = por %p48, %p49
      %s51 = ssub.s32 %s17, %s24
      %p52 = scmp.eq.s32.totalorder %s51, 0
      %s54 = sadd.s32 %s53, 1
      %s55 = scalar_select %p52, %s53, %s54
      %p58 = pneg %p52
      %p59 = scmp.eq.s32.totalorder %s17, 1
      %p60 = por %p58, %p59
      %p61 = scmp.ne.s32.totalorder %s53, %s56
      %p62 = scmp.eq.s32.totalorder %s17, 0
      %p63 = por %p61, %p62
      %p64 = scmp.ne.s32.totalorder %s53, %s56
      %p65 = scmp.eq.s32.totalorder %s22, 1
      %p66 = por %p64, %p65
      %p67 = scmp.ne.s32.totalorder %s56, %s57
      %p68 = scmp.eq.s32.totalorder %s22, 0
      %p69 = por %p67, %p68
      %p70 = scmp.ne.s32.totalorder %s56, %s57
      %p71 = scmp.eq.s32.totalorder %s23, 1
      %p72 = por %p70, %p71
      %p74 = scmp.ne.s32.totalorder %s57, %s73
      %p75 = scmp.eq.s32.totalorder %s23, 0
      %p76 = por %p74, %p75
      %s77 = ssub.s32 %s17, %s24
      %p78 = scmp.eq.s32.totalorder %s77, 0
      %s80 = sadd.s32 %s79, 1
      %s81 = scalar_select %p78, %s79, %s80
      %p84 = pneg %p78
      %p85 = scmp.eq.s32.totalorder %s17, 1
      %p86 = por %p84, %p85
      %p87 = scmp.ne.s32.totalorder %s79, %s82
      %p88 = scmp.eq.s32.totalorder %s17, 0
      %p89 = por %p87, %p88
      %p90 = scmp.ne.s32.totalorder %s79, %s82
      %p91 = scmp.eq.s32.totalorder %s22, 1
      %p92 = por %p90, %p91
      %p93 = scmp.ne.s32.totalorder %s82, %s83
      %p94 = scmp.eq.s32.totalorder %s22, 0
      %p95 = por %p93, %p94
      %p96 = scmp.ne.s32.totalorder %s82, %s83
      %p97 = scmp.eq.s32.totalorder %s23, 1
      %p98 = por %p96, %p97
      %p100 = scmp.ne.s32.totalorder %s83, %s99
      %p101 = scmp.eq.s32.totalorder %s23, 0
      %p102 = por %p100, %p101
      %p103 = scmp.le.s32.totalorder 1, %s17
      %p104 = scmp.lt.s32.totalorder %s17, 3
      %p105 = pnand %p103, %p104
      %p106 = pneg %p105
      // Predicated region
      $region9: #{tpu_custom_call.1} parent=5 // pred_check
        _
      $region10: #{tpu_custom_call.1} parent=5 // pred_check_branch
        %108 = sbr.rel (%p105) target = $region12
      $region11: #{tpu_custom_call.1} parent=5 // pred_region
        %s109 = ssub.s32 %s17, 1
      $region12: #{tpu_custom_call.1} parent=5 // pred_fallthru
        _
      %p110 = scmp.lt.s32.totalorder %s17, 2
      // Predicated region
      $region13: #{tpu_custom_call.1} parent=5 // pred_check
        %p111 = pneg %p110
      $region14: #{tpu_custom_call.1} parent=5 // pred_check_branch
        %113 = sbr.rel (%p111) target = $region16
      $region15: #{tpu_custom_call.1} parent=5 // pred_region
        // Predicated region
        $region17: #{tpu_custom_call.1} parent=15 // pred_check
          %p114 = pneg %p37
        $region18: #{tpu_custom_call.1} parent=15 // pred_check_branch
          %116 = sbr.rel (%p114) target = $region20
        $region19: #{tpu_custom_call.1} parent=15 // pred_region
          %s117 = sand.u32 %s27, 1
          %s118 = scalar_lea.sflag [#allocation3], %s117
          %s119 = sand.u32 %s27, 1
          %s120 = smul.addr %s119, 32
          %s121 = scalar_lea.vmem [#allocation2], %s120
          %s123 = ssub.s32 512, 512
          %124 = vsyncadd %s118, %s123
          %s125 = smul.addr %s17, 4
          %s126 = smul.addr %s125, 128
          %s127 = scalar_lea.hbm %s0, %s126
          %s128 = sshll.u32 %s121, 4
          %s129 = int_to_ptr.vmem [resolvable:$true] %s128
          %134 = dma.hbm_to_vmem [thread:$0]  %s127, 512, %s129, %s118, 128, 128, 8
        $region20: #{tpu_custom_call.1} parent=15 // pred_fallthru
          _
        // Predicated region
        $region21: #{tpu_custom_call.1} parent=15 // pred_check
          %p135 = pneg %p63
        $region22: #{tpu_custom_call.1} parent=15 // pred_check_branch
          %137 = sbr.rel (%p135) target = $region24
        $region23: #{tpu_custom_call.1} parent=15 // pred_region
          %s138 = sand.u32 %s53, 1
          %s139 = scalar_lea.sflag [#allocation6], %s138
          %s140 = sand.u32 %s53, 1
          %s141 = smul.addr %s140, 64
          %s142 = scalar_lea.vmem [#allocation5], %s141
          %s144 = ssub.s32 1024, 1024
          %145 = vsyncadd %s139, %s144
          %s146 = smul.addr %s17, 8
          %s147 = smul.addr %s146, 128
          %s148 = scalar_lea.hbm %s1, %s147
          %s149 = sshll.u32 %s142, 4
          %s150 = int_to_ptr.vmem [resolvable:$true] %s149
          %155 = dma.hbm_to_vmem [thread:$0]  %s148, 1024, %s150, %s139, 128, 128, 8
        $region24: #{tpu_custom_call.1} parent=15 // pred_fallthru
          _
      $region16: #{tpu_custom_call.1} parent=5 // pred_fallthru
        _
      %p156 = scmp.le.s32.totalorder 1, %s17
      %p157 = scmp.lt.s32.totalorder %s17, 3
      %p158 = pnand %p156, %p157
      %p159 = pneg %p158
      // Predicated region
      $region25: #{tpu_custom_call.1} parent=5 // pred_check
        _
      $region26: #{tpu_custom_call.1} parent=5 // pred_check_branch
        %161 = sbr.rel (%p158) target = $region28
      $region27: #{tpu_custom_call.1} parent=5 // pred_region
        %s162 = ssub.s32 %s17, 1
        %s163 = sand.u32 %s30, 1
        %s164 = scalar_lea.sflag [#allocation3], %s163
        %s165 = sand.u32 %s30, 1
        %s166 = smul.addr %s165, 32
        %s167 = scalar_lea.vmem [#allocation2], %s166
        // Predicated region
        $region29: #{tpu_custom_call.1} parent=27 // pred_check
          %p168 = pneg %p43
        $region30: #{tpu_custom_call.1} parent=27 // pred_check_branch
          %170 = sbr.rel (%p168) target = $region32
        $region31: #{tpu_custom_call.1} parent=27 // pred_region
          %171 = dma.done %s164, 512
        $region32: #{tpu_custom_call.1} parent=27 // pred_fallthru
          _
        %s172 = sand.u32 %s56, 1
        %s173 = scalar_lea.sflag [#allocation6], %s172
        %s174 = sand.u32 %s56, 1
        %s175 = smul.addr %s174, 64
        %s176 = scalar_lea.vmem [#allocation5], %s175
        // Predicated region
        $region33: #{tpu_custom_call.1} parent=27 // pred_check
          %p177 = pneg %p69
        $region34: #{tpu_custom_call.1} parent=27 // pred_check_branch
          %179 = sbr.rel (%p177) target = $region36
        $region35: #{tpu_custom_call.1} parent=27 // pred_region
          %180 = dma.done %s173, 1024
        $region36: #{tpu_custom_call.1} parent=27 // pred_fallthru
          _
        %s181 = sand.u32 %s30, 1
        %s182 = scalar_lea.sflag [#allocation3], %s181
        %s183 = sand.u32 %s30, 1
        %s184 = smul.addr %s183, 32
        %s185 = scalar_lea.vmem [#allocation2], %s184
        %p186 = pneg %p43
        %p187 = pneg %p40
        %s188 = sand.u32 %s56, 1
        %s189 = scalar_lea.sflag [#allocation6], %s188
        %s190 = sand.u32 %s56, 1
        %s191 = smul.addr %s190, 64
        %s192 = scalar_lea.vmem [#allocation5], %s191
        %p193 = pneg %p69
        %p194 = pneg %p66
        %p195 = pneg %p95
        %p196 = pneg %p92
        %s197 = sand.u32 %s82, 1
        %s198 = scalar_lea.sflag [#allocation4], %s197
        %s199 = sand.u32 %s82, 1
        %s200 = smul.addr %s199, 16
        %s201 = scalar_lea.vmem [#allocation7], %s200
        %v202 = vld [vmem:[%s167] sm:$0xff]
        %v203 = vld [vmem:[%s167 + $0x8] sm:$0xff]
        %v204 = vld [vmem:[%s176] sm:$0xff]
        %v205 = vld [vmem:[%s176 + $0x8] sm:$0xff]
        %v206 = vld [vmem:[%s176 + $0x10] sm:$0xff]
        %v207 = vld [vmem:[%s176 + $0x18] sm:$0xff]
        %vm208 = vcmask 261120
        %v209 = vsel %vm208, %v202, 0.0
        %210 = vadd.xlane.f32.xlu0 %v209
        %v211 = vpop.xlane.xlu0 %210
        %v212 = vsel %vm208, %v203, 0.0
        %213 = vadd.xlane.f32.xlu0 %v212
        %v214 = vpop.xlane.xlu0 %213
        %v215 = vadd.f32 %v211, 0.0
        %v216 = vadd.f32 %v214, 0.0
        %s217 = scalar_lea.vmem %s167, 16 [#allocation2]
        %v218 = vld [vmem:[%s217] sm:$0xff]
        %v219 = vld [vmem:[%s217 + $0x8] sm:$0xff]
        %s220 = scalar_lea.vmem %s176, 32 [#allocation5]
        %v221 = vld [vmem:[%s220] sm:$0xff]
        %v222 = vld [vmem:[%s220 + $0x8] sm:$0xff]
        %v223 = vld [vmem:[%s220 + $0x10] sm:$0xff]
        %v224 = vld [vmem:[%s220 + $0x18] sm:$0xff]
        %v226 = vsel %vm208, %v218, 0
        %v229 = vsel %vm208, %v219, 0
        %231 = vmatprep.subr.mxu0 0.0
        %232 = vmatpush1.msra.mxu0 %v221
        %233 = vmatprep.subr.mxu0 0.0
        %234 = vmatpush1.msra.mxu0 %v222
        %235 = vmatprep.subr.mxu0 0.0
        %236 = vmatpush1.msra.mxu0 %v223
        %237 = vmatprep.subr.mxu0 0.0
        %238 = vmatpush1.msra.mxu0 %v224
        %239 = vmatprep.subr.mxu0 0.0
        %240 = vmatpush1.msra.mxu0 0.0
        %241 = vmatprep.subr.mxu0 0.0
        %242 = vmatpush1.msra.mxu0 0.0
        %243 = vmatprep.subr.mxu0 0.0
        %244 = vmatpush1.msra.mxu0 0.0
        %245 = vmatprep.subr.mxu0 0.0
        %246 = vmatpush1.msra.mxu0 0.0
        %247 = vmatprep.subr.mxu0 0.0
        %248 = vmatpush1.msra.mxu0 0.0
        %249 = vmatprep.subr.mxu0 0.0
        %250 = vmatpush1.msra.mxu0 0.0
        %251 = vmatprep.subr.mxu0 0.0
        %252 = vmatpush1.msra.mxu0 0.0
        %253 = vmatprep.subr.mxu0 0.0
        %254 = vmatpush1.msra.mxu0 0.0
        %255 = vmatprep.subr.mxu0 0.0
        %256 = vmatpush1.msra.mxu0 0.0
        %257 = vmatprep.subr.mxu0 0.0
        %258 = vmatpush1.msra.mxu0 0.0
        %259 = vmatprep.subr.mxu0 0.0
        %260 = vmatpush1.msra.mxu0 0.0
        %261 = vmatprep.subr.mxu0 0.0
        %262 = vmatpush1.msra.mxu0 0.0
        %263 = vmatprep.subr.mxu0 0.0
        %264 = vmatpush1.msra.mxu0 0.0
        %265 = vmatprep.subr.mxu0 0.0
        %266 = vmatpush1.msra.mxu0 0.0
        %267 = vmatprep.subr.mxu0 0.0
        %268 = vmatpush1.msra.mxu0 0.0
        %269 = vmatprep.subr.mxu0 0.0
        %270 = vmatpush1.msra.mxu0 0.0
        %271 = vmatprep.subr.mxu0 0.0
        %272 = vmatpush1.msra.mxu0 0.0
        %273 = vmatprep.subr.mxu0 0.0
        %274 = vmatpush1.msra.mxu0 0.0
        %275 = vmatprep.subr.mxu0 0.0
        %276 = vmatpush1.msra.mxu0 0.0
        %277 = vmatprep.subr.mxu0 0.0
        %278 = vmatpush1.msra.mxu0 0.0
        %279 = vmatprep.subr.mxu0 0.0
        %280 = vmatpush1.msra.mxu0 0.0
        %281 = vmatprep.subr.mxu0 0.0
        %282 = vmatpush1.msra.mxu0 0.0
        %283 = vmatprep.subr.mxu0 0.0
        %284 = vmatpush1.msra.mxu0 0.0
        %285 = vmatprep.subr.mxu0 0.0
        %286 = vmatpush1.msra.mxu0 0.0
        %287 = vmatprep.subr.mxu0 0.0
        %288 = vmatpush1.msra.mxu0 0.0
        %289 = vmatprep.subr.mxu0 0.0
        %290 = vmatpush1.msra.mxu0 0.0
        %291 = vmatprep.subr.mxu0 0.0
        %292 = vmatpush1.msra.mxu0 0.0
        %293 = vmatprep.subr.mxu0 0.0
        %294 = vmatpush1.msra.mxu0 0.0
        %295 = vmatprep.mubr.f32.mxu0 0.0
        %296 = vmatmul.mubr.f32.gmra.mrb[0].mxu0 %v226
        %v297 = vpop.f32.mrb[0].mxu0
        %v298 = vadd.f32 0.0, %v297
        %v299 = vpop.f32.mrb[0].mxu0
        %300 = vmatprep.mubr.f32.mxu0 0.0
        %301 = vmatmul.mubr.f32.gmra.mrb[0].mxu0 %v229
        %v302 = vpop.f32.mrb[0].mxu0
        %v303 = vadd.f32 0.0, %v302
        %v304 = vpop.f32.mrb[0].mxu0
        %305 = vdwg.mxu0
        %v307 = vsel %vm208, %v202, 0
        %v310 = vsel %vm208, %v203, 0
        %312 = vmatprep.subr.mxu0 0.0
        %313 = vmatpush1.msra.mxu0 %v204
        %314 = vmatprep.subr.mxu0 0.0
        %315 = vmatpush1.msra.mxu0 %v205
        %316 = vmatprep.subr.mxu0 0.0
        %317 = vmatpush1.msra.mxu0 %v206
        %318 = vmatprep.subr.mxu0 0.0
        %319 = vmatpush1.msra.mxu0 %v207
        %320 = vmatprep.subr.mxu0 0.0
        %321 = vmatpush1.msra.mxu0 0.0
        %322 = vmatprep.subr.mxu0 0.0
        %323 = vmatpush1.msra.mxu0 0.0
        %324 = vmatprep.subr.mxu0 0.0
        %325 = vmatpush1.msra.mxu0 0.0
        %326 = vmatprep.subr.mxu0 0.0
        %327 = vmatpush1.msra.mxu0 0.0
        %328 = vmatprep.subr.mxu0 0.0
        %329 = vmatpush1.msra.mxu0 0.0
        %330 = vmatprep.subr.mxu0 0.0
        %331 = vmatpush1.msra.mxu0 0.0
        %332 = vmatprep.subr.mxu0 0.0
        %333 = vmatpush1.msra.mxu0 0.0
        %334 = vmatprep.subr.mxu0 0.0
        %335 = vmatpush1.msra.mxu0 0.0
        %336 = vmatprep.subr.mxu0 0.0
        %337 = vmatpush1.msra.mxu0 0.0
        %338 = vmatprep.subr.mxu0 0.0
        %339 = vmatpush1.msra.mxu0 0.0
        %340 = vmatprep.subr.mxu0 0.0
        %341 = vmatpush1.msra.mxu0 0.0
        %342 = vmatprep.subr.mxu0 0.0
        %343 = vmatpush1.msra.mxu0 0.0
        %344 = vmatprep.subr.mxu0 0.0
        %345 = vmatpush1.msra.mxu0 0.0
        %346 = vmatprep.subr.mxu0 0.0
        %347 = vmatpush1.msra.mxu0 0.0
        %348 = vmatprep.subr.mxu0 0.0
        %349 = vmatpush1.msra.mxu0 0.0
        %350 = vmatprep.subr.mxu0 0.0
        %351 = vmatpush1.msra.mxu0 0.0
        %352 = vmatprep.subr.mxu0 0.0
        %353 = vmatpush1.msra.mxu0 0.0
        %354 = vmatprep.subr.mxu0 0.0
        %355 = vmatpush1.msra.mxu0 0.0
        %356 = vmatprep.subr.mxu0 0.0
        %357 = vmatpush1.msra.mxu0 0.0
        %358 = vmatprep.subr.mxu0 0.0
        %359 = vmatpush1.msra.mxu0 0.0
        %360 = vmatprep.subr.mxu0 0.0
        %361 = vmatpush1.msra.mxu0 0.0
        %362 = vmatprep.subr.mxu0 0.0
        %363 = vmatpush1.msra.mxu0 0.0
        %364 = vmatprep.subr.mxu0 0.0
        %365 = vmatpush1.msra.mxu0 0.0
        %366 = vmatprep.subr.mxu0 0.0
        %367 = vmatpush1.msra.mxu0 0.0
        %368 = vmatprep.subr.mxu0 0.0
        %369 = vmatpush1.msra.mxu0 0.0
        %370 = vmatprep.subr.mxu0 0.0
        %371 = vmatpush1.msra.mxu0 0.0
        %372 = vmatprep.subr.mxu0 0.0
        %373 = vmatpush1.msra.mxu0 0.0
        %374 = vmatprep.subr.mxu0 0.0
        %375 = vmatpush1.msra.mxu0 0.0
        %376 = vmatprep.mubr.f32.mxu0 0.0
        %377 = vmatmul.mubr.f32.gmra.mrb[0].mxu0 %v307
        %v378 = vpop.f32.mrb[0].mxu0
        %v379 = vadd.f32 %v298, %v378
        %v380 = vpop.f32.mrb[0].mxu0
        %381 = vmatprep.mubr.f32.mxu0 0.0
        %382 = vmatmul.mubr.f32.gmra.mrb[0].mxu0 %v310
        %v383 = vpop.f32.mrb[0].mxu0
        %v384 = vadd.f32 %v303, %v383
        %v385 = vpop.f32.mrb[0].mxu0
        %386 = vdwg.mxu0
        %v387 = vsel %vm208, %v218, 0.0
        %388 = vadd.xlane.f32.xlu0 %v387
        %v389 = vpop.xlane.xlu0 %388
        %v390 = vsel %vm208, %v219, 0.0
        %391 = vadd.xlane.f32.xlu0 %v390
        %v392 = vpop.xlane.xlu0 %391
        %v393 = vadd.f32 %v215, %v389
        %v394 = vadd.f32 %v216, %v392
        %v395 = vmax.f32 %v393, 1.0
        %v396 = vmax.f32 %v394, 1.0
        %v397 = vrcp.pop %v395
        %v398 = vmul.f32 %v379, %v397
        %v399 = vrcp.pop %v396
        %v400 = vmul.f32 %v384, %v399
        %401 = vst [vmem:[%s201] sm:$0xff] %v398
        %402 = vst [vmem:[%s201 + $0x8] sm:$0xff] %v400
        %s403 = sand.u32 %s82, 1
        %s404 = scalar_lea.sflag [#allocation4], %s403
        %s405 = sand.u32 %s82, 1
        %s406 = smul.addr %s405, 16
        %s407 = scalar_lea.vmem [#allocation7], %s406
        // Predicated region
        $region37: #{tpu_custom_call.1} parent=27 // pred_check
          %p408 = pneg %p92
        $region38: #{tpu_custom_call.1} parent=27 // pred_check_branch
          %410 = sbr.rel (%p408) target = $region40
        $region39: #{tpu_custom_call.1} parent=27 // pred_region
          %s412 = ssub.s32 256, 256
          %413 = vsyncadd %s404, %s412
          %s414 = smul.addr %s22, 2
          %s415 = smul.addr %s414, 128
          %s416 = scalar_lea.hbm %s2, %s415
          %s417 = sshll.u32 %s407, 4
          %s418 = int_to_ptr.vmem [resolvable:$true] %s417
          %423 = dma.vmem_to_hbm [thread:$0]  %s418, 256, %s416, %s404, 128, 128, 8
        $region40: #{tpu_custom_call.1} parent=27 // pred_fallthru
          _
      $region28: #{tpu_custom_call.1} parent=5 // pred_fallthru
        _
      %p424 = scmp.le.s32.totalorder 2, %s17
      // Predicated region
      $region41: #{tpu_custom_call.1} parent=5 // pred_check
        %p425 = pneg %p424
      $region42: #{tpu_custom_call.1} parent=5 // pred_check_branch
        %427 = sbr.rel (%p425) target = $region44
      $region43: #{tpu_custom_call.1} parent=5 // pred_region
        %s428 = ssub.s32 %s17, 2
        // Predicated region
        $region45: #{tpu_custom_call.1} parent=43 // pred_check
          %p429 = pneg %p98
        $region46: #{tpu_custom_call.1} parent=43 // pred_check_branch
          %431 = sbr.rel (%p429) target = $region48
        $region47: #{tpu_custom_call.1} parent=43 // pred_region
          %s432 = sand.u32 %s83, 1
          %s433 = scalar_lea.sflag [#allocation4], %s432
          %s434 = sand.u32 %s83, 1
          %s435 = smul.addr %s434, 16
          %s436 = scalar_lea.vmem [#allocation7], %s435
          %437 = dma.done %s433, 256
        $region48: #{tpu_custom_call.1} parent=43 // pred_fallthru
          _
      $region44: #{tpu_custom_call.1} parent=5 // pred_fallthru
        _
    $region6: #{tpu_custom_call.1} parent=1 // loop_footer
      %s21 = sadd.s32 1, %s17
    $region7: #{tpu_custom_call.1} parent=1 // loop_footer_branch
      %16 = sbr.rel target = $region3
    $region8: #{tpu_custom_call.1} parent=1 // loop_exit
      _
    %438 = vsyncpa [#allocation3], 1
    %s439 = scalar_lea.sflag [#allocation3], 1
    %440 = vsyncpa %s439, 1
    %441 = vsyncpa [#allocation6], 1
    %s442 = scalar_lea.sflag [#allocation6], 1
    %443 = vsyncpa %s442, 1
    %444 = vsyncpa [#allocation4], 1
    %s445 = scalar_lea.sflag [#allocation4], 1
    %446 = vsyncpa %s445, 1

</llo_original>
